<compile_context>
chip_gen: v7x
topology: tpu7x:2x2x1
jax: 0.10.0
libtpu: 0.0.40
codegen_flags: <defaults>
</compile_context>

<pallas_src>
import functools

import jax
import jax.numpy as jnp
from jax.experimental import pallas as pl
from jax.experimental.pallas import tpu as pltpu

LANES = 128
DEFAULT_BLOCK_ROWS = 2048   # 2048 x 128 x 4B = 1 MiB per f32 input tile
NUM_CORES = 2               # v7x has 2 TensorCores; harmless on 1-TC chips


def _bce_kernel(out_ref, tgt_ref, res_ref, acc_ref, *,
                n_elems, denom, block_rows, steps_per_core):
    c = pl.program_id(0)   # core slice (parallel)
    i = pl.program_id(1)   # streaming step within the slice (arbitrary)

    @pl.when(i == 0)
    def _():
        acc_ref[...] = jnp.zeros_like(acc_ref)

    # Cast on the VPU (free relative to the HBM bound); inputs keep their
    # original dtype in HBM.
    o = out_ref[...].astype(jnp.float32)
    t = tgt_ref[...].astype(jnp.float32)

    # PyTorch BCELoss clamps each log term at -100.
    log_o = jnp.maximum(jnp.log(o), jnp.float32(-100.0))
    log_1mo = jnp.maximum(jnp.log(1.0 - o), jnp.float32(-100.0))
    loss = -(t * log_o + (1.0 - t) * log_1mo)

    # Mask out padded / out-of-bounds elements (tail block, clamped blocks).
    # NOTE: int32 flat index is fine for < ~2^31 elements.
    row_ids = jax.lax.broadcasted_iota(jnp.int32, loss.shape, 0)
    lane_ids = jax.lax.broadcasted_iota(jnp.int32, loss.shape, 1)
    start_row = (c * steps_per_core + i) * block_rows
    flat_idx = (start_row + row_ids) * LANES + lane_ids
    mask = flat_idx < n_elems

    acc_ref[...] += jnp.where(mask, loss, jnp.float32(0.0))

    @pl.when(i == steps_per_core - 1)
    def _():
        # One cross-lane/sublane reduction per core slice.
        res_ref[0, 0] = jnp.sum(acc_ref[...]) / jnp.float32(denom)


def _sublane_multiple(dtype):
    itemsize = jnp.dtype(dtype).itemsize
    return max(8, 32 // itemsize)   # f32: 8, bf16: 16, int8/fp8: 32


def bce_loss(output, target, reduction="mean",
             block_rows_target=DEFAULT_BLOCK_ROWS, num_cores=NUM_CORES):
    """BCE loss (PyTorch nn.BCELoss forward) via a Pallas TPU kernel."""
    assert output.shape == target.shape
    n = output.size
    assert n > 0

    o_flat = output.reshape(-1)
    t_flat = target.reshape(-1)

    # Only pad the tiny remainder to a multiple of 128 lanes (usually a no-op);
    # padded elements are masked out inside the kernel.
    rem = n % LANES
    if rem:
        pad = LANES - rem
        o_flat = jnp.pad(o_flat, (0, pad))
        t_flat = jnp.pad(t_flat, (0, pad))

    rows = o_flat.size // LANES
    o2 = o_flat.reshape(rows, LANES)
    t2 = t_flat.reshape(rows, LANES)

    sub = max(_sublane_multiple(o2.dtype), _sublane_multiple(t2.dtype))
    block_rows = min(block_rows_target, pl.cdiv(rows, sub) * sub)

    g = pl.cdiv(rows, block_rows)               # total row-blocks to stream
    nc = num_cores if g >= num_cores else 1     # cores used
    spc = pl.cdiv(g, nc)                        # steps per core

    denom = float(n) if reduction == "mean" else 1.0
    kernel = functools.partial(
        _bce_kernel, n_elems=n, denom=denom,
        block_rows=block_rows, steps_per_core=spc)

    def in_map(c, i):
        # Clamp so we never request a block fully past the array; the element
        # mask zeroes any duplicated contribution.
        return (jnp.minimum(c * spc + i, g - 1), 0)

    bytes_in = (o2.size * o2.dtype.itemsize) + (t2.size * t2.dtype.itemsize)

    partials = pl.pallas_call(
        kernel,
        out_shape=jax.ShapeDtypeStruct((nc, 1), jnp.float32),
        grid_spec=pltpu.PrefetchScalarGridSpec(
            num_scalar_prefetch=0,
            grid=(nc, spc),
            in_specs=[
                pl.BlockSpec((block_rows, LANES), in_map),
                pl.BlockSpec((block_rows, LANES), in_map),
            ],
            out_specs=pl.BlockSpec((1, 1), lambda c, i: (c, 0),
                                   memory_space=pltpu.SMEM),
            scratch_shapes=[pltpu.VMEM((block_rows, LANES), jnp.float32)],
        ),
        compiler_params=pltpu.CompilerParams(
            dimension_semantics=("parallel", "arbitrary")),
        cost_estimate=pl.CostEstimate(
            flops=8 * n, transcendentals=2 * n,
            bytes_accessed=bytes_in + 4 * nc),
    )(o2, t2)

    # Each partial is already divided by `denom`; summing gives the reduction.
    return jnp.sum(partials)


def bce_loss_ref(output, target, reduction="mean"):
    # Pure-JAX reference mirroring torch.nn.BCELoss (log clamped at -100).
    o = output.astype(jnp.float32)
    t = target.astype(jnp.float32)
    log_o = jnp.maximum(jnp.log(o), -100.0)
    log_1mo = jnp.maximum(jnp.log(1.0 - o), -100.0)
    l = -(t * log_o + (1.0 - t) * log_1mo)
    return jnp.mean(l) if reduction == "mean" else jnp.sum(l)


if __name__ == "__main__":
    key = jax.random.PRNGKey(0)
    k1, k2, k3 = jax.random.split(key, 3)

    # Small NCHW-style inputs consistent with a per-pixel BCE loss.
    shape = (2, 4, 16, 16)
    output = jax.nn.sigmoid(jax.random.normal(k1, shape, dtype=jnp.float32))
    target = jax.random.uniform(k2, shape, dtype=jnp.float32)        # soft targets
    hard_t = (jax.random.uniform(k3, shape) > 0.5).astype(jnp.float32)  # hard {0,1}

    loss = bce_loss(output, target)
    jax.block_until_ready(loss)
    assert jnp.allclose(loss, bce_loss_ref(output, target),
                        rtol=1e-5, atol=1e-6), (loss, bce_loss_ref(output, target))

    loss_hard = bce_loss(output, hard_t)
    jax.block_until_ready(loss_hard)
    assert jnp.allclose(loss_hard, bce_loss_ref(output, hard_t),
                        rtol=1e-5, atol=1e-6)

    # Odd element count (exercises the in-kernel tail mask / minimal pad path).
    shape2 = (3, 5, 7)
    o_small = jax.nn.sigmoid(jax.random.normal(k1, shape2, dtype=jnp.float32))
    t_small = jax.random.uniform(k2, shape2, dtype=jnp.float32)
    loss_small = bce_loss(o_small, t_small)
    jax.block_until_ready(loss_small)
    assert jnp.allclose(loss_small, bce_loss_ref(o_small, t_small),
                        rtol=1e-5, atol=1e-6)

    print("KERNEL_OK")
</pallas_src>

<mosaic_0001>
module attributes {stable_mosaic.version = 11 : i64} {
  func.func @_bce_kernel(%arg0: i32, %arg1: i32, %arg2: memref<16x128xf32, #tpu.memory_space<vmem>>, %arg3: memref<16x128xf32, #tpu.memory_space<vmem>>, %arg4: memref<1x1xf32, #tpu.memory_space<smem>>, %arg5: memref<16x128xf32, #tpu.memory_space<vmem>>) attributes {dimension_semantics = [#tpu.dimension_semantics<parallel>, #tpu.dimension_semantics<arbitrary>], iteration_bounds = array<i64: 1, 1>, scalar_prefetch = 0 : i64, scratch_operands = 1 : i64, tpu.core_type = #tpu.core_type<tc>, window_params = [{transform_indices = @transform_0, window_bounds = array<i64: 16, 128>}, {transform_indices = @transform_1, window_bounds = array<i64: 16, 128>}, {transform_indices = @transform_2, window_bounds = array<i64: 1, 1>}]} {
    %c0_i32 = arith.constant 0 : i32
    %0 = arith.cmpi eq, %arg1, %c0_i32 : i32
    %1 = arith.extui %0 : i1 to i32
    %c0_i32_0 = arith.constant 0 : i32
    %2 = arith.cmpi ne, %1, %c0_i32_0 : i32
    scf.if %2 {
      %cst_15 = arith.constant 0.000000e+00 : f32
      %40 = vector.broadcast %cst_15 : f32 to vector<16x128xf32>
      %c0_16 = arith.constant 0 : index
      %c0_17 = arith.constant 0 : index
      %41 = vector.load %arg5[%c0_16, %c0_17] : memref<16x128xf32, #tpu.memory_space<vmem>>, vector<16x128xf32>
      tpu.vector_store %arg5[%c0_16, %c0_17], %40 {strides = array<i32>} : memref<16x128xf32, #tpu.memory_space<vmem>>, vector<16x128xf32>,
    } else {
    }
    %c0 = arith.constant 0 : index
    %c0_1 = arith.constant 0 : index
    %3 = vector.load %arg2[%c0, %c0_1] : memref<16x128xf32, #tpu.memory_space<vmem>>, vector<16x128xf32>
    %c0_2 = arith.constant 0 : index
    %c0_3 = arith.constant 0 : index
    %4 = vector.load %arg3[%c0_2, %c0_3] : memref<16x128xf32, #tpu.memory_space<vmem>>, vector<16x128xf32>
    %5 = math.log %3 : vector<16x128xf32>
    %cst = arith.constant -1.000000e+02 : f32
    %6 = vector.broadcast %cst : f32 to vector<16x128xf32>
    %7 = arith.maximumf %5, %6 : vector<16x128xf32>
    %cst_4 = arith.constant 1.000000e+00 : f32
    %8 = vector.broadcast %cst_4 : f32 to vector<16x128xf32>
    %9 = arith.subf %8, %3 : vector<16x128xf32>
    %10 = math.log %9 : vector<16x128xf32>
    %cst_5 = arith.constant -1.000000e+02 : f32
    %11 = vector.broadcast %cst_5 : f32 to vector<16x128xf32>
    %12 = arith.maximumf %10, %11 : vector<16x128xf32>
    %13 = arith.mulf %4, %7 : vector<16x128xf32>
    %cst_6 = arith.constant 1.000000e+00 : f32
    %14 = vector.broadcast %cst_6 : f32 to vector<16x128xf32>
    %15 = arith.subf %14, %4 : vector<16x128xf32>
    %16 = arith.mulf %15, %12 : vector<16x128xf32>
    %17 = arith.addf %13, %16 : vector<16x128xf32>
    %cst_7 = arith.constant 0.000000e+00 : f32
    %18 = vector.broadcast %cst_7 : f32 to vector<16x128xf32>
    %19 = arith.subf %18, %17 : vector<16x128xf32>
    %20 = tpu.iota {dimensions = array<i32: 0>} : vector<16x128xi32>
    %21 = tpu.iota {dimensions = array<i32: 1>} : vector<16x128xi32>
    %c1_i32 = arith.constant 1 : i32
    %22 = arith.muli %arg0, %c1_i32 : i32
    %23 = arith.addi %22, %arg1 : i32
    %c16_i32 = arith.constant 16 : i32
    %24 = arith.muli %23, %c16_i32 : i32
    %25 = vector.broadcast %24 : i32 to vector<16x128xi32>
    %26 = arith.addi %25, %20 : vector<16x128xi32>
    %c128_i32 = arith.constant 128 : i32
    %27 = vector.broadcast %c128_i32 : i32 to vector<16x128xi32>
    %28 = arith.muli %26, %27 : vector<16x128xi32>
    %29 = arith.addi %28, %21 : vector<16x128xi32>
    %c2048_i32 = arith.constant 2048 : i32
    %30 = vector.broadcast %c2048_i32 : i32 to vector<16x128xi32>
    %31 = arith.cmpi slt, %29, %30 : vector<16x128xi32>
    %c0_8 = arith.constant 0 : index
    %c0_9 = arith.constant 0 : index
    %32 = vector.load %arg5[%c0_8, %c0_9] : memref<16x128xf32, #tpu.memory_space<vmem>>, vector<16x128xf32>
    %cst_10 = arith.constant 0.000000e+00 : f32
    %33 = vector.broadcast %cst_10 : f32 to vector<16x128xf32>
    %34 = arith.select %31, %19, %33 : vector<16x128xi1>, vector<16x128xf32>
    %35 = arith.addf %32, %34 : vector<16x128xf32>
    %c0_11 = arith.constant 0 : index
    %c0_12 = arith.constant 0 : index
    %36 = vector.load %arg5[%c0_11, %c0_12] : memref<16x128xf32, #tpu.memory_space<vmem>>, vector<16x128xf32>
    tpu.vector_store %arg5[%c0_11, %c0_12], %35 {strides = array<i32>} : memref<16x128xf32, #tpu.memory_space<vmem>>, vector<16x128xf32>,
    %c0_i32_13 = arith.constant 0 : i32
    %37 = arith.cmpi eq, %arg1, %c0_i32_13 : i32
    %38 = arith.extui %37 : i1 to i32
    %c0_i32_14 = arith.constant 0 : i32
    %39 = arith.cmpi ne, %38, %c0_i32_14 : i32
    scf.if %39 {
      %c0_15 = arith.constant 0 : index
      %c0_16 = arith.constant 0 : index
      %40 = vector.load %arg5[%c0_15, %c0_16] : memref<16x128xf32, #tpu.memory_space<vmem>>, vector<16x128xf32>
      %41 = vector.shape_cast %40 : vector<16x128xf32> to vector<1x16x128xf32>
      %cst_17 = arith.constant dense<0.000000e+00> : vector<1xf32>
      %42 = vector.multi_reduction <add>, %41, %cst_17 [1, 2] : vector<1x16x128xf32> to vector<1xf32>
      %43 = vector.shape_cast %42 : vector<1xf32> to vector<1x1x1xf32>
      %44 = vector.extract %43[0, 0, 0] : f32 from vector<1x1x1xf32>
      %cst_18 = arith.constant 2.048000e+03 : f32
      %45 = arith.divf %44, %cst_18 : f32
      %c0_19 = arith.constant 0 : index
      %c0_20 = arith.constant 0 : index
      %46 = memref.load %arg4[%c0_19, %c0_20] : memref<1x1xf32, #tpu.memory_space<smem>>
      memref.store %45, %arg4[%c0_19, %c0_20] : memref<1x1xf32, #tpu.memory_space<smem>>
    } else {
    }
    return
  }
  func.func @transform_0(%arg0: i32, %arg1: i32) -> (i32, i32) {
    %c1_i32 = arith.constant 1 : i32
    %0 = arith.muli %arg0, %c1_i32 : i32
    %1 = arith.addi %0, %arg1 : i32
    %c0_i32 = arith.constant 0 : i32
    %2 = arith.minsi %1, %c0_i32 : i32
    %c0_i32_0 = arith.constant 0 : i32
    %c0_i32_1 = arith.constant 0 : i32
    return %2, %c0_i32_0 : i32, i32
  }
  func.func @transform_1(%arg0: i32, %arg1: i32) -> (i32, i32) {
    %c1_i32 = arith.constant 1 : i32
    %0 = arith.muli %arg0, %c1_i32 : i32
    %1 = arith.addi %0, %arg1 : i32
    %c0_i32 = arith.constant 0 : i32
    %2 = arith.minsi %1, %c0_i32 : i32
    %c0_i32_0 = arith.constant 0 : i32
    %c0_i32_1 = arith.constant 0 : i32
    return %2, %c0_i32_0 : i32, i32
  }
  func.func @transform_2(%arg0: i32, %arg1: i32) -> (i32, i32) {
    %c0_i32 = arith.constant 0 : i32
    %c0_i32_0 = arith.constant 0 : i32
    return %arg0, %c0_i32 : i32, i32
  }
}

</mosaic_0001>

<llo_original>
// kernel: tpu_custom_call.1
$region0: #{tpu_custom_call.1}
  #allocation0 [shape = 'u32[]', space=smem, size = 0x4, offset = 0x4, fixed_abs, tag = 'smem constant byte address 0x4 - core index']
  #allocation1 [shape = 'u32[144,128]{1,0:T(1,128)}', space=vmem, size = 0x12000, scoped, tag = 'internal scratch']
  #allocation2 [shape = 'f32[16,128]{1,0:T(8,128)}', space=vmem, size = 0x2000, scoped, tag = 'scratch operand']
  %s0 = inlined_call_operand.hbm [shape: f32[16,128], index: 0, kind: input, shape index: {}]
  %s1 = inlined_call_operand.hbm [shape: f32[16,128], index: 1, kind: input, shape index: {}]
  %s2 = inlined_call_operand.hbm [shape: f32[1,1], index: 2, kind: output, shape index: {}]
  %s3 = sld [smem:[#allocation0]]
  $region34: #{tpu_custom_call.1} parent=0
    _
  %s5 = ssub.s32 1, %s3
  %s6 = scalar_select 0, %s5, %s3
  $region1: #{tpu_custom_call.1} parent=0
    #allocation3 [shape = 'u8[8192]{0}', space=vmem, size = 0x2000, scoped, tag = 'input window, operand 0, single buffered']
    #allocation4 [shape = 's32[1]{0}', space=sflag, size = 0x4, scoped, tag = 'scoped memory for tpu_custom_call.1']
    #allocation5 [shape = 's32[1]{0}', space=sflag, size = 0x4, scoped, tag = 'scoped memory for tpu_custom_call.1']
    #allocation6 [shape = 'u8[8192]{0}', space=vmem, size = 0x2000, scoped, tag = 'input window, operand 1, single buffered']
    #allocation7 [shape = 's32[1]{0}', space=sflag, size = 0x4, scoped, tag = 'scoped memory for tpu_custom_call.1']
    #allocation8 [shape = 'u8[512]{0}', space=smem, size = 0x200, scoped, tag = 'output window, operand 0, single buffered']
    %7 = vsyncpa [#allocation4], 0
    %8 = vsyncpa [#allocation7], 0
    %9 = vsyncpa [#allocation5], 0
    // Predicated region
    $region2: #{tpu_custom_call.1} parent=1 // pred_check
      _
    $region3: #{tpu_custom_call.1} parent=1 // pred_check_branch
      %11 = sbr.rel (0) target = $region5
    $region4: #{tpu_custom_call.1} parent=1 // pred_region
      %s12 = sadd.s32 0, 0
      %p13 = scmp.lt.s32.totalorder %s12, 0
      %s14 = scalar_select %p13, %s12, 0
      %s15 = smul.u32 2, %s14
      %s17 = ssub.s32 256, 256
      %18 = vsyncadd [#allocation4], %s17
      %s19 = smul.addr %s15, 128
      %s20 = scalar_lea.hbm %s0, %s19
      %s21 = sshll.u32 [#allocation3], 4
      %s22 = int_to_ptr.vmem [resolvable:$true] %s21
      %27 = dma.hbm_to_vmem [thread:$0]  %s20, 256, %s22, [#allocation4], 128, 128, 8
    $region5: #{tpu_custom_call.1} parent=1 // pred_fallthru
      _
    // Predicated region
    $region6: #{tpu_custom_call.1} parent=1 // pred_check
      _
    $region7: #{tpu_custom_call.1} parent=1 // pred_check_branch
      %29 = sbr.rel (0) target = $region9
    $region8: #{tpu_custom_call.1} parent=1 // pred_region
      %s30 = sadd.s32 0, 0
      %p31 = scmp.lt.s32.totalorder %s30, 0
      %s32 = scalar_select %p31, %s30, 0
      %s33 = smul.u32 2, %s32
      %s35 = ssub.s32 256, 256
      %36 = vsyncadd [#allocation7], %s35
      %s37 = smul.addr %s33, 128
      %s38 = scalar_lea.hbm %s1, %s37
      %s39 = sshll.u32 [#allocation6], 4
      %s40 = int_to_ptr.vmem [resolvable:$true] %s39
      %45 = dma.hbm_to_vmem [thread:$0]  %s38, 256, %s40, [#allocation7], 128, 128, 8
    $region9: #{tpu_custom_call.1} parent=1 // pred_fallthru
      _
    // Predicated region
    $region10: #{tpu_custom_call.1} parent=1 // pred_check
      _
    $region11: #{tpu_custom_call.1} parent=1 // pred_check_branch
      %47 = sbr.rel (0) target = $region13
    $region12: #{tpu_custom_call.1} parent=1 // pred_region
      %48 = dma.done [#allocation4], 256
    $region13: #{tpu_custom_call.1} parent=1 // pred_fallthru
      _
    // Predicated region
    $region14: #{tpu_custom_call.1} parent=1 // pred_check
      _
    $region15: #{tpu_custom_call.1} parent=1 // pred_check_branch
      %50 = sbr.rel (0) target = $region17
    $region16: #{tpu_custom_call.1} parent=1 // pred_region
      %51 = dma.done [#allocation7], 256
    $region17: #{tpu_custom_call.1} parent=1 // pred_fallthru
      _
    %s52 = sadd.s32 0, 0
    %p53 = scmp.lt.s32.totalorder %s52, 0
    %s54 = scalar_select %p53, %s52, 0
    %s55 = smul.u32 2, %s54
    %s56 = sadd.s32 0, 0
    %p57 = scmp.lt.s32.totalorder %s56, 0
    %s58 = scalar_select %p57, %s56, 0
    %s59 = smul.u32 2, %s58
    %p60 = scmp.eq.s32.totalorder 0, 0
    // Predicated region
    $region18: #{tpu_custom_call.1} parent=1 // pred_check
      %p61 = pneg %p60
    $region19: #{tpu_custom_call.1} parent=1 // pred_check_branch
      %63 = sbr.rel (%p61) target = $region21
    $region20: #{tpu_custom_call.1} parent=1 // pred_region
      %64 = vst [vmem:[#allocation2] sm:$0xff] 0.0
      %65 = vst [vmem:[#allocation2 + $0x8] sm:$0xff] 0.0
    $region21: #{tpu_custom_call.1} parent=1 // pred_fallthru
      _
    %v66 = vld [vmem:[#allocation3] sm:$0xff]
    %v67 = vld [vmem:[#allocation3 + $0x8] sm:$0xff]
    %v68 = vld [vmem:[#allocation6] sm:$0xff]
    %v69 = vld [vmem:[#allocation6 + $0x8] sm:$0xff]
    %v70 = vlog2.pop %v66
    %v71 = vmul.f32 %v70, 0.6931472
    %v72 = vlog2.pop %v67
    %v73 = vmul.f32 %v72, 0.6931472
    %v74 = vmax.f32 %v71, -100.0
    %v75 = vmax.f32 %v73, -100.0
    %v76 = vsub.f32 1.0, %v66
    %v77 = vsub.f32 1.0, %v67
    %v78 = vlog2.pop %v76
    %v79 = vmul.f32 %v78, 0.6931472
    %v80 = vlog2.pop %v77
    %v81 = vmul.f32 %v80, 0.6931472
    %v82 = vmax.f32 %v79, -100.0
    %v83 = vmax.f32 %v81, -100.0
    %v84 = vmul.f32 %v68, %v74
    %v85 = vmul.f32 %v69, %v75
    %v86 = vsub.f32 1.0, %v68
    %v87 = vsub.f32 1.0, %v69
    %v88 = vmul.f32 %v86, %v82
    %v89 = vmul.f32 %v87, %v83
    %v90 = vadd.f32 %v84, %v88
    %v91 = vadd.f32 %v85, %v89
    %v92 = vsub.f32 0.0, %v90
    %v93 = vsub.f32 0.0, %v91
    %v94 = vlaneseq
    %v95 = vshrl.u32 %v94, 7
    %v96 = vadd.s32 %v95, 8
    %v97 = vlaneseq
    %v98 = vand.u32 %v97, 127
    %s99 = sadd.s32 0, 0
    %s100 = smul.u32 %s99, 16
    %v101 = vstv %s100
    %v102 = vadd.s32 %v101, %v95
    %v103 = vadd.s32 %v101, %v96
    %v104 = vmul.u32 %v102, 128
    %v105 = vmul.u32 %v103, 128
    %v106 = vadd.s32 %v104, %v98
    %v107 = vadd.s32 %v105, %v98
    %vm108 = vcmp.lt.s32.totalorder %v106, 2048
    %vm109 = vcmp.lt.s32.totalorder %v107, 2048
    %v110 = vld [vmem:[#allocation2] sm:$0xff]
    %v111 = vld [vmem:[#allocation2 + $0x8] sm:$0xff]
    %v112 = vsel %vm108, %v92, 0.0
    %v113 = vsel %vm109, %v93, 0.0
    %v114 = vadd.f32 %v110, %v112
    %v115 = vadd.f32 %v111, %v113
    %116 = vst [vmem:[#allocation2] sm:$0xff] %v114
    %117 = vst [vmem:[#allocation2 + $0x8] sm:$0xff] %v115
    // Predicated region
    $region22: #{tpu_custom_call.1} parent=1 // pred_check
      %p118 = pneg %p60
    $region23: #{tpu_custom_call.1} parent=1 // pred_check_branch
      %120 = sbr.rel (%p118) target = $region25
    $region24: #{tpu_custom_call.1} parent=1 // pred_region
      %v121 = vld [vmem:[#allocation2] sm:$0xff]
      %v122 = vld [vmem:[#allocation2 + $0x8] sm:$0xff]
      %v123 = vadd.f32 %v121, %v122
      %124 = vadd.xlane.f32.xlu0 %v123
      %v125 = vpop.xlane.xlu0 %124
      %v126 = vrot.slane %v125, 4
      %v127 = vadd.f32 %v125, %v126
      %v128 = vrot.slane %v127, 2
      %v129 = vadd.f32 %v127, %v128
      %v130 = vrot.slane %v129, 1
      %v131 = vadd.f32 %v129, %v130
      %s132 = vtos %v131
      %v133 = vrcp.pop 2048.0
      %s134 = vtos %v133
      %s135 = smul.f32 %s132, %s134
      %s136 = scalar_lea.smem [#allocation8], 0
      %137 = sst [smem:[%s136]] %s135
    $region25: #{tpu_custom_call.1} parent=1 // pred_fallthru
      _
    // Predicated region
    $region26: #{tpu_custom_call.1} parent=1 // pred_check
      _
    $region27: #{tpu_custom_call.1} parent=1 // pred_check_branch
      %139 = sbr.rel (0) target = $region29
    $region28: #{tpu_custom_call.1} parent=1 // pred_region
      %s141 = ssub.s32 16, 16
      %142 = vsyncadd [#allocation5], %s141
      %145 = dma.smem_to_hbm [#allocation8], 16, %s2, [#allocation5]
    $region29: #{tpu_custom_call.1} parent=1 // pred_fallthru
      _
    // Predicated region
    $region30: #{tpu_custom_call.1} parent=1 // pred_check
      _
    $region31: #{tpu_custom_call.1} parent=1 // pred_check_branch
      %147 = sbr.rel (0) target = $region33
    $region32: #{tpu_custom_call.1} parent=1 // pred_region
      %148 = dma.done [#allocation5], 16
    $region33: #{tpu_custom_call.1} parent=1 // pred_fallthru
      _
    %149 = sfence
    %150 = vsyncpa [#allocation4], 1
    %151 = vsyncpa [#allocation7], 1
    %152 = vsyncpa [#allocation5], 1

</llo_original>
